<compile_context>
chip_gen: v7x
topology: tpu7x:2x2x1
jax: 0.10.0
libtpu: 0.0.40
codegen_flags: <defaults>
</compile_context>

<pallas_src>
import jax
import jax.numpy as jnp
from jax import lax
from jax.experimental import pallas as pl
from jax.experimental.pallas import tpu as pltpu

# ----------------------------- configuration -----------------------------
PAD_IDX = 0
BOS_IDX = 1
EOS_IDX = 2

B = 2          # batch
S_SRC = 8      # source length
S_TRG = 9      # target length (decoder sees S_TRG - 1 tokens)
T = S_TRG - 1  # decoder / target length after shift
D = 32         # model dim
V = 128        # (shared) vocab size

NS = B * S_SRC  # packed source rows (batch folded into sublanes)
NT = B * T      # packed target rows


# ------------------------------ Pallas kernel -----------------------------
def _translation_kernel(
    # packed-batch activations
    src_emb_ref,    # (NS, D)  f32   embedded source, batch packed on sublanes
    trg_emb_ref,    # (NT, D)  f32   embedded (shifted) target
    src_mask_ref,   # (NS, 1)  f32   src != pad
    trg_mask_ref,   # (NT, 1)  f32   ne(pad) - eq(eos)
    bias_ref,       # (NT, NS) f32   0 if same sample & src not pad, else -1e9
    # parameters
    w_enc_ref,      # (D, D)
    b_enc_ref,      # (1, D)
    w_qs_ref,       # (D, 2D) = [w_q | w_self]   (fused, shared LHS = trg_emb)
    w_kv_ref,       # (D, 2D) = [w_k | w_v]      (fused, shared LHS = enc)
    w_ctx_ref,      # (D, D)
    b_dec_ref,      # (1, D)
    w_gen_ref,      # (D, V)
    b_gen_ref,      # (1, V)
    # output
    logp_ref,       # (NT, V)  f32   lane-dense log_probs slab
):
    f32 = jnp.float32
    src_x = src_emb_ref[...]          # (NS, D)
    trg_x = trg_emb_ref[...]          # (NT, D)

    # ---- encoder: position-wise projection, masked by source pad mask ----
    enc = jnp.tanh(
        jnp.dot(src_x, w_enc_ref[...], preferred_element_type=f32) + b_enc_ref[...]
    ) * src_mask_ref[...]                                          # (NS, D)

    # ---- fused projections sharing an LHS: [q | self], [k | v] ----
    trg_qs = jnp.dot(trg_x, w_qs_ref[...], preferred_element_type=f32)  # (NT, 2D)
    enc_kv = jnp.dot(enc, w_kv_ref[...], preferred_element_type=f32)    # (NS, 2D)
    q, self_h = trg_qs[:, :D], trg_qs[:, D:]
    k, v = enc_kv[:, :D], enc_kv[:, D:]

    # ---- block-diagonal cross-attention over the packed batch ----
    scale = f32(1.0 / (D ** 0.5))
    scores = lax.dot_general(
        q, k, dimension_numbers=(((1,), (1,)), ((), ())),
        preferred_element_type=f32,
    ) * scale + bias_ref[...]                                      # (NT, NS)
    s_max = jnp.max(scores, axis=-1, keepdims=True)
    p = jnp.exp(scores - s_max)
    p = p * pl.reciprocal(jnp.sum(p, axis=-1, keepdims=True), approx=True)
    ctx = jnp.dot(p, v, preferred_element_type=f32)                # (NT, D)

    # ---- decoder output (self projection already fused into trg_qs) ----
    dec = jnp.tanh(
        self_h
        + jnp.dot(ctx, w_ctx_ref[...], preferred_element_type=f32)
        + b_dec_ref[...]
    ) * trg_mask_ref[...]                                          # (NT, D)

    # ---- generator: linear to vocab + log_softmax (lane-dense output) ----
    logits = jnp.dot(dec, w_gen_ref[...], preferred_element_type=f32) + b_gen_ref[...]
    l_max = jnp.max(logits, axis=-1, keepdims=True)
    z = logits - l_max
    lse = jnp.log(jnp.sum(jnp.exp(z), axis=-1, keepdims=True))
    logp_ref[...] = z - lse                                        # (NT, V)


# ------------------------------ JAX wrapper -------------------------------
@jax.jit
def translation_forward(src_indices, trg_indices, params):
    """Mirrors TranslationModel.forward: returns {'log_probs', 'nll'}."""
    f32 = jnp.float32

    # ---- glue: embedding lookups, shifting, mask construction ----
    src_emb = jnp.take(params["src_embedding"], src_indices, axis=0)      # (B,S,D)
    decoder_input = trg_indices[:, :-1]                                   # (B,T)
    targets = trg_indices[:, 1:]                                          # (B,T)
    trg_emb = jnp.take(params["trg_embedding"], decoder_input, axis=0)    # (B,T,D)

    src_valid = src_indices != PAD_IDX                                    # (B,S) bool
    trg_pad_mask = (
        (decoder_input != PAD_IDX).astype(f32)
        - (decoder_input == EOS_IDX).astype(f32)
    )                                                                     # (B,T)

    # ---- pack the batch along sublanes (single kernel invocation) ----
    src_emb2 = src_emb.reshape(NS, D)
    trg_emb2 = trg_emb.reshape(NT, D)
    src_mask2 = src_valid.astype(f32).reshape(NS, 1)
    trg_mask2 = trg_pad_mask.reshape(NT, 1)

    # additive attention bias: 0 where same sample AND src not pad, else -1e9
    t_batch = jnp.arange(NT, dtype=jnp.int32) // T
    s_batch = jnp.arange(NS, dtype=jnp.int32) // S_SRC
    allowed = (t_batch[:, None] == s_batch[None, :]) & src_valid.reshape(NS)[None, :]
    attn_bias = jnp.where(allowed, 0.0, -1e9).astype(f32)                 # (NT,NS)

    # fuse the projections that share an LHS
    w_qs = jnp.concatenate([params["w_q"], params["w_self"]], axis=1)     # (D,2D)
    w_kv = jnp.concatenate([params["w_k"], params["w_v"]], axis=1)        # (D,2D)

    full = lambda i: (0, 0)
    grid_spec = pltpu.PrefetchScalarGridSpec(
        num_scalar_prefetch=0,
        grid=(1,),                                   # single step: whole batch fused
        in_specs=[
            pl.BlockSpec((NS, D), full),             # src_emb (packed)
            pl.BlockSpec((NT, D), full),             # trg_emb (packed)
            pl.BlockSpec((NS, 1), full),             # src mask
            pl.BlockSpec((NT, 1), full),             # trg mask
            pl.BlockSpec((NT, NS), full),            # attention bias
            pl.BlockSpec((D, D), full),              # w_enc
            pl.BlockSpec((1, D), full),              # b_enc
            pl.BlockSpec((D, 2 * D), full),          # w_qs = [w_q | w_self]
            pl.BlockSpec((D, 2 * D), full),          # w_kv = [w_k | w_v]
            pl.BlockSpec((D, D), full),              # w_ctx
            pl.BlockSpec((1, D), full),              # b_dec
            pl.BlockSpec((D, V), full),              # w_gen
            pl.BlockSpec((1, V), full),              # b_gen
        ],
        out_specs=pl.BlockSpec((NT, V), full),       # lane-dense log_probs slab
    )

    logp2 = pl.pallas_call(
        _translation_kernel,
        grid_spec=grid_spec,
        out_shape=jax.ShapeDtypeStruct((NT, V), f32),
        compiler_params=pltpu.CompilerParams(
            dimension_semantics=("arbitrary",),
        ),
    )(
        src_emb2, trg_emb2, src_mask2, trg_mask2, attn_bias,
        params["w_enc"], params["b_enc"], w_qs, w_kv,
        params["w_ctx"], params["b_dec"],
        params["w_gen"], params["b_gen"],
    )

    log_probs = logp2.reshape(B, T, V)

    # NLLLoss(ignore_index=pad, reduction='none'): gather on the lane-dense
    # kernel output in the wrapper instead of a last-dim-1 masked store.
    tgt_flat = targets.reshape(NT)
    picked = jnp.take_along_axis(logp2, tgt_flat[:, None], axis=1)[:, 0]
    nll = -picked * (tgt_flat != PAD_IDX).astype(f32)
    return {"log_probs": log_probs, "nll": nll}


# -------------------------- pure-JAX reference ----------------------------
def translation_reference(src_indices, trg_indices, params):
    f32 = jnp.float32
    src_emb = jnp.take(params["src_embedding"], src_indices, axis=0)
    decoder_input = trg_indices[:, :-1]
    targets = trg_indices[:, 1:]
    trg_emb = jnp.take(params["trg_embedding"], decoder_input, axis=0)
    src_m = (src_indices != PAD_IDX).astype(f32)[..., None]               # (B,S,1)
    trg_m = ((decoder_input != PAD_IDX).astype(f32)
             - (decoder_input == EOS_IDX).astype(f32))[..., None]         # (B,T,1)
    enc = jnp.tanh(src_emb @ params["w_enc"] + params["b_enc"]) * src_m
    q = trg_emb @ params["w_q"]
    k = enc @ params["w_k"]
    v = enc @ params["w_v"]
    scores = jnp.einsum("btd,bsd->bts", q, k) / jnp.sqrt(jnp.asarray(D, f32))
    scores = scores + (1.0 - jnp.swapaxes(src_m, 1, 2)) * (-1e9)
    p = jax.nn.softmax(scores, axis=-1)
    ctx = jnp.einsum("bts,bsd->btd", p, v)
    dec = jnp.tanh(trg_emb @ params["w_self"] + ctx @ params["w_ctx"]
                   + params["b_dec"]) * trg_m
    logits = dec @ params["w_gen"] + params["b_gen"]
    logp = jax.nn.log_softmax(logits, axis=-1)
    picked = jnp.take_along_axis(logp, targets[..., None], axis=-1)[..., 0]
    nll = (-picked * (targets != PAD_IDX).astype(f32)).reshape(-1)
    return {"log_probs": logp, "nll": nll}


def init_params(key):
    ks = jax.random.split(key, 12)
    s = 0.1
    return {
        "src_embedding": s * jax.random.normal(ks[0], (V, D), jnp.float32),
        "trg_embedding": s * jax.random.normal(ks[1], (V, D), jnp.float32),
        "w_enc":  s * jax.random.normal(ks[2], (D, D), jnp.float32),
        "b_enc":  jnp.zeros((1, D), jnp.float32),
        "w_q":    s * jax.random.normal(ks[3], (D, D), jnp.float32),
        "w_k":    s * jax.random.normal(ks[4], (D, D), jnp.float32),
        "w_v":    s * jax.random.normal(ks[5], (D, D), jnp.float32),
        "w_self": s * jax.random.normal(ks[6], (D, D), jnp.float32),
        "w_ctx":  s * jax.random.normal(ks[7], (D, D), jnp.float32),
        "b_dec":  jnp.zeros((1, D), jnp.float32),
        "w_gen":  s * jax.random.normal(ks[8], (D, V), jnp.float32),
        "b_gen":  jnp.zeros((1, V), jnp.float32),
    }


if __name__ == "__main__":
    key = jax.random.PRNGKey(0)
    k_par, k_src, k_trg = jax.random.split(key, 3)

    params = init_params(k_par)

    # deterministic token ids (with BOS / EOS / PAD structure)
    src_indices = jax.random.randint(k_src, (B, S_SRC), 3, V, dtype=jnp.int32)
    src_indices = src_indices.at[:, -2:].set(PAD_IDX)            # pad tail
    trg_indices = jax.random.randint(k_trg, (B, S_TRG), 3, V, dtype=jnp.int32)
    trg_indices = trg_indices.at[:, 0].set(BOS_IDX)
    trg_indices = trg_indices.at[:, -2].set(EOS_IDX)
    trg_indices = trg_indices.at[:, -1].set(PAD_IDX)

    out = translation_forward(src_indices, trg_indices, params)
    jax.block_until_ready(out)

    assert out["log_probs"].shape == (B, T, V)
    assert out["nll"].shape == (B * T,)
    # sanity: rows of log_probs sum (in prob space) to ~1
    probs_sum = jnp.sum(jnp.exp(out["log_probs"]), axis=-1)
    assert bool(jnp.all(jnp.abs(probs_sum - 1.0) < 1e-4))

    # correctness vs. pure-JAX reference (loose tol: approx reciprocal in attn)
    ref = translation_reference(src_indices, trg_indices, params)
    assert bool(jnp.max(jnp.abs(out["log_probs"] - ref["log_probs"])) < 2e-2)
    assert bool(jnp.max(jnp.abs(out["nll"] - ref["nll"])) < 2e-2)

    # TODO(synk): beam-search inference path (BeamSearch/SearchStrategy) has no
    # clean single-kernel Pallas equivalent; only the training forward is fused.

    print("KERNEL_OK")
</pallas_src>

<mosaic_0001>
module attributes {stable_mosaic.version = 11 : i64} {
  func.func @_translation_kernel(%arg0: i32, %arg1: memref<16x32xf32, #tpu.memory_space<vmem>>, %arg2: memref<16x32xf32, #tpu.memory_space<vmem>>, %arg3: memref<16x1xf32, #tpu.memory_space<vmem>>, %arg4: memref<16x1xf32, #tpu.memory_space<vmem>>, %arg5: memref<16x16xf32, #tpu.memory_space<vmem>>, %arg6: memref<32x32xf32, #tpu.memory_space<vmem>>, %arg7: memref<1x32xf32, #tpu.memory_space<vmem>>, %arg8: memref<32x64xf32, #tpu.memory_space<vmem>>, %arg9: memref<32x64xf32, #tpu.memory_space<vmem>>, %arg10: memref<32x32xf32, #tpu.memory_space<vmem>>, %arg11: memref<1x32xf32, #tpu.memory_space<vmem>>, %arg12: memref<32x128xf32, #tpu.memory_space<vmem>>, %arg13: memref<1x128xf32, #tpu.memory_space<vmem>>, %arg14: memref<16x128xf32, #tpu.memory_space<vmem>>) attributes {dimension_semantics = [#tpu.dimension_semantics<arbitrary>], iteration_bounds = array<i64: 1>, scalar_prefetch = 0 : i64, scratch_operands = 0 : i64, tpu.core_type = #tpu.core_type<tc>, window_params = [{pipeline_mode = #tpu.pipeline_mode<synchronous>, transform_indices = @transform_0, window_bounds = array<i64: 16, 32>}, {pipeline_mode = #tpu.pipeline_mode<synchronous>, transform_indices = @transform_1, window_bounds = array<i64: 16, 32>}, {pipeline_mode = #tpu.pipeline_mode<synchronous>, transform_indices = @transform_2, window_bounds = array<i64: 16, 1>}, {pipeline_mode = #tpu.pipeline_mode<synchronous>, transform_indices = @transform_3, window_bounds = array<i64: 16, 1>}, {pipeline_mode = #tpu.pipeline_mode<synchronous>, transform_indices = @transform_4, window_bounds = array<i64: 16, 16>}, {pipeline_mode = #tpu.pipeline_mode<synchronous>, transform_indices = @transform_5, window_bounds = array<i64: 32, 32>}, {pipeline_mode = #tpu.pipeline_mode<synchronous>, transform_indices = @transform_6, window_bounds = array<i64: 1, 32>}, {pipeline_mode = #tpu.pipeline_mode<synchronous>, transform_indices = @transform_7, window_bounds = array<i64: 32, 64>}, {pipeline_mode = #tpu.pipeline_mode<synchronous>, transform_indices = @transform_8, window_bounds = array<i64: 32, 64>}, {pipeline_mode = #tpu.pipeline_mode<synchronous>, transform_indices = @transform_9, window_bounds = array<i64: 32, 32>}, {pipeline_mode = #tpu.pipeline_mode<synchronous>, transform_indices = @transform_10, window_bounds = array<i64: 1, 32>}, {pipeline_mode = #tpu.pipeline_mode<synchronous>, transform_indices = @transform_11, window_bounds = array<i64: 32, 128>}, {pipeline_mode = #tpu.pipeline_mode<synchronous>, transform_indices = @transform_12, window_bounds = array<i64: 1, 128>}, {pipeline_mode = #tpu.pipeline_mode<synchronous>, transform_indices = @transform_13, window_bounds = array<i64: 16, 128>}]} {
    %c0 = arith.constant 0 : index
    %c0_0 = arith.constant 0 : index
    %0 = vector.load %arg1[%c0, %c0_0] : memref<16x32xf32, #tpu.memory_space<vmem>>, vector<16x32xf32>
    %c0_1 = arith.constant 0 : index
    %c0_2 = arith.constant 0 : index
    %1 = vector.load %arg2[%c0_1, %c0_2] : memref<16x32xf32, #tpu.memory_space<vmem>>, vector<16x32xf32>
    %c0_3 = arith.constant 0 : index
    %c0_4 = arith.constant 0 : index
    %2 = vector.load %arg6[%c0_3, %c0_4] : memref<32x32xf32, #tpu.memory_space<vmem>>, vector<32x32xf32>
    %cst = arith.constant dense<0.000000e+00> : vector<16x32xf32>
    %3 = tpu.matmul %0, %2, %cst {dimension_numbers = #tpu.dot_dimension_numbers<[1], [0], [0], [1], [0, 0, 1, 1], [], []>} : vector<16x32xf32>, vector<32x32xf32>, vector<16x32xf32> -> vector<16x32xf32>
    %c0_5 = arith.constant 0 : index
    %c0_6 = arith.constant 0 : index
    %4 = vector.load %arg7[%c0_5, %c0_6] : memref<1x32xf32, #tpu.memory_space<vmem>>, vector<1x32xf32>
    %5 = vector.broadcast %4 : vector<1x32xf32> to vector<16x32xf32>
    %6 = arith.addf %3, %5 : vector<16x32xf32>
    %7 = math.tanh %6 : vector<16x32xf32>
    %c0_7 = arith.constant 0 : index
    %c0_8 = arith.constant 0 : index
    %8 = vector.load %arg3[%c0_7, %c0_8] : memref<16x1xf32, #tpu.memory_space<vmem>>, vector<16x1xf32>
    %9 = vector.broadcast %8 : vector<16x1xf32> to vector<16x32xf32>
    %10 = arith.mulf %7, %9 : vector<16x32xf32>
    %c0_9 = arith.constant 0 : index
    %c0_10 = arith.constant 0 : index
    %11 = vector.load %arg8[%c0_9, %c0_10] : memref<32x64xf32, #tpu.memory_space<vmem>>, vector<32x64xf32>
    %cst_11 = arith.constant dense<0.000000e+00> : vector<16x64xf32>
    %12 = tpu.matmul %1, %11, %cst_11 {dimension_numbers = #tpu.dot_dimension_numbers<[1], [0], [0], [1], [0, 0, 1, 1], [], []>} : vector<16x32xf32>, vector<32x64xf32>, vector<16x64xf32> -> vector<16x64xf32>
    %c0_12 = arith.constant 0 : index
    %c0_13 = arith.constant 0 : index
    %13 = vector.load %arg9[%c0_12, %c0_13] : memref<32x64xf32, #tpu.memory_space<vmem>>, vector<32x64xf32>
    %cst_14 = arith.constant dense<0.000000e+00> : vector<16x64xf32>
    %14 = tpu.matmul %10, %13, %cst_14 {dimension_numbers = #tpu.dot_dimension_numbers<[1], [0], [0], [1], [0, 0, 1, 1], [], []>} : vector<16x32xf32>, vector<32x64xf32>, vector<16x64xf32> -> vector<16x64xf32>
    %15 = vector.extract_strided_slice %12 {offsets = [0, 0], sizes = [16, 32], strides = [1, 1]} : vector<16x64xf32> to vector<16x32xf32>
    %16 = vector.extract_strided_slice %12 {offsets = [0, 32], sizes = [16, 32], strides = [1, 1]} : vector<16x64xf32> to vector<16x32xf32>
    %17 = vector.extract_strided_slice %14 {offsets = [0, 0], sizes = [16, 32], strides = [1, 1]} : vector<16x64xf32> to vector<16x32xf32>
    %18 = vector.extract_strided_slice %14 {offsets = [0, 32], sizes = [16, 32], strides = [1, 1]} : vector<16x64xf32> to vector<16x32xf32>
    %cst_15 = arith.constant dense<0.000000e+00> : vector<16x16xf32>
    %19 = tpu.matmul %15, %17, %cst_15 {dimension_numbers = #tpu.dot_dimension_numbers<[1], [1], [0], [0], [0, 0, 1, 0], [], []>} : vector<16x32xf32>, vector<16x32xf32>, vector<16x16xf32> -> vector<16x16xf32>
    %cst_16 = arith.constant 0.176776692 : f32
    %20 = vector.broadcast %cst_16 : f32 to vector<16x16xf32>
    %21 = arith.mulf %19, %20 : vector<16x16xf32>
    %c0_17 = arith.constant 0 : index
    %c0_18 = arith.constant 0 : index
    %22 = vector.load %arg5[%c0_17, %c0_18] : memref<16x16xf32, #tpu.memory_space<vmem>>, vector<16x16xf32>
    %23 = arith.addf %21, %22 : vector<16x16xf32>
    %cst_19 = arith.constant dense<0xFF800000> : vector<16xf32>
    %24 = vector.multi_reduction <maximumf>, %23, %cst_19 [1] : vector<16x16xf32> to vector<16xf32>
    %25 = vector.shape_cast %24 : vector<16xf32> to vector<16x1xf32>
    %26 = vector.broadcast %25 : vector<16x1xf32> to vector<16x16xf32>
    %27 = arith.subf %23, %26 : vector<16x16xf32>
    %28 = math.exp %27 : vector<16x16xf32>
    %cst_20 = arith.constant dense<0.000000e+00> : vector<16xf32>
    %29 = vector.multi_reduction <add>, %28, %cst_20 [1] : vector<16x16xf32> to vector<16xf32>
    %30 = vector.shape_cast %29 : vector<16xf32> to vector<16x1xf32>
    %31 = tpu.reciprocal %30 {approx = true} : vector<16x1xf32> -> vector<16x1xf32>
    %32 = vector.broadcast %31 : vector<16x1xf32> to vector<16x16xf32>
    %33 = arith.mulf %28, %32 : vector<16x16xf32>
    %cst_21 = arith.constant dense<0.000000e+00> : vector<16x32xf32>
    %34 = tpu.matmul %33, %18, %cst_21 {dimension_numbers = #tpu.dot_dimension_numbers<[1], [0], [0], [1], [0, 0, 1, 1], [], []>} : vector<16x16xf32>, vector<16x32xf32>, vector<16x32xf32> -> vector<16x32xf32>
    %c0_22 = arith.constant 0 : index
    %c0_23 = arith.constant 0 : index
    %35 = vector.load %arg10[%c0_22, %c0_23] : memref<32x32xf32, #tpu.memory_space<vmem>>, vector<32x32xf32>
    %cst_24 = arith.constant dense<0.000000e+00> : vector<16x32xf32>
    %36 = tpu.matmul %34, %35, %cst_24 {dimension_numbers = #tpu.dot_dimension_numbers<[1], [0], [0], [1], [0, 0, 1, 1], [], []>} : vector<16x32xf32>, vector<32x32xf32>, vector<16x32xf32> -> vector<16x32xf32>
    %37 = arith.addf %16, %36 : vector<16x32xf32>
    %c0_25 = arith.constant 0 : index
    %c0_26 = arith.constant 0 : index
    %38 = vector.load %arg11[%c0_25, %c0_26] : memref<1x32xf32, #tpu.memory_space<vmem>>, vector<1x32xf32>
    %39 = vector.broadcast %38 : vector<1x32xf32> to vector<16x32xf32>
    %40 = arith.addf %37, %39 : vector<16x32xf32>
    %41 = math.tanh %40 : vector<16x32xf32>
    %c0_27 = arith.constant 0 : index
    %c0_28 = arith.constant 0 : index
    %42 = vector.load %arg4[%c0_27, %c0_28] : memref<16x1xf32, #tpu.memory_space<vmem>>, vector<16x1xf32>
    %43 = vector.broadcast %42 : vector<16x1xf32> to vector<16x32xf32>
    %44 = arith.mulf %41, %43 : vector<16x32xf32>
    %c0_29 = arith.constant 0 : index
    %c0_30 = arith.constant 0 : index
    %45 = vector.load %arg12[%c0_29, %c0_30] : memref<32x128xf32, #tpu.memory_space<vmem>>, vector<32x128xf32>
    %cst_31 = arith.constant dense<0.000000e+00> : vector<16x128xf32>
    %46 = tpu.matmul %44, %45, %cst_31 {dimension_numbers = #tpu.dot_dimension_numbers<[1], [0], [0], [1], [0, 0, 1, 1], [], []>} : vector<16x32xf32>, vector<32x128xf32>, vector<16x128xf32> -> vector<16x128xf32>
    %c0_32 = arith.constant 0 : index
    %c0_33 = arith.constant 0 : index
    %47 = vector.load %arg13[%c0_32, %c0_33] : memref<1x128xf32, #tpu.memory_space<vmem>>, vector<1x128xf32>
    %48 = vector.broadcast %47 : vector<1x128xf32> to vector<16x128xf32>
    %49 = arith.addf %46, %48 : vector<16x128xf32>
    %cst_34 = arith.constant dense<0xFF800000> : vector<16xf32>
    %50 = vector.multi_reduction <maximumf>, %49, %cst_34 [1] : vector<16x128xf32> to vector<16xf32>
    %51 = vector.shape_cast %50 : vector<16xf32> to vector<16x1xf32>
    %52 = vector.broadcast %51 : vector<16x1xf32> to vector<16x128xf32>
    %53 = arith.subf %49, %52 : vector<16x128xf32>
    %54 = math.exp %53 : vector<16x128xf32>
    %cst_35 = arith.constant dense<0.000000e+00> : vector<16xf32>
    %55 = vector.multi_reduction <add>, %54, %cst_35 [1] : vector<16x128xf32> to vector<16xf32>
    %56 = vector.shape_cast %55 : vector<16xf32> to vector<16x1xf32>
    %57 = math.log %56 : vector<16x1xf32>
    %58 = vector.broadcast %57 : vector<16x1xf32> to vector<16x128xf32>
    %59 = arith.subf %53, %58 : vector<16x128xf32>
    %c0_36 = arith.constant 0 : index
    %c0_37 = arith.constant 0 : index
    %60 = vector.load %arg14[%c0_36, %c0_37] : memref<16x128xf32, #tpu.memory_space<vmem>>, vector<16x128xf32>
    tpu.vector_store %arg14[%c0_36, %c0_37], %59 {strides = array<i32>} : memref<16x128xf32, #tpu.memory_space<vmem>>, vector<16x128xf32>,
    return
  }
  func.func @transform_0(%arg0: i32) -> (i32, i32) {
    %c0_i32 = arith.constant 0 : i32
    %c0_i32_0 = arith.constant 0 : i32
    %c0_i32_1 = arith.constant 0 : i32
    return %c0_i32, %c0_i32_0 : i32, i32
  }
  func.func @transform_1(%arg0: i32) -> (i32, i32) {
    %c0_i32 = arith.constant 0 : i32
    %c0_i32_0 = arith.constant 0 : i32
    %c0_i32_1 = arith.constant 0 : i32
    return %c0_i32, %c0_i32_0 : i32, i32
  }
  func.func @transform_2(%arg0: i32) -> (i32, i32) {
    %c0_i32 = arith.constant 0 : i32
    %c0_i32_0 = arith.constant 0 : i32
    %c0_i32_1 = arith.constant 0 : i32
    return %c0_i32, %c0_i32_0 : i32, i32
  }
  func.func @transform_3(%arg0: i32) -> (i32, i32) {
    %c0_i32 = arith.constant 0 : i32
    %c0_i32_0 = arith.constant 0 : i32
    %c0_i32_1 = arith.constant 0 : i32
    return %c0_i32, %c0_i32_0 : i32, i32
  }
  func.func @transform_4(%arg0: i32) -> (i32, i32) {
    %c0_i32 = arith.constant 0 : i32
    %c0_i32_0 = arith.constant 0 : i32
    %c0_i32_1 = arith.constant 0 : i32
    return %c0_i32, %c0_i32_0 : i32, i32
  }
  func.func @transform_5(%arg0: i32) -> (i32, i32) {
    %c0_i32 = arith.constant 0 : i32
    %c0_i32_0 = arith.constant 0 : i32
    %c0_i32_1 = arith.constant 0 : i32
    return %c0_i32, %c0_i32_0 : i32, i32
  }
  func.func @transform_6(%arg0: i32) -> (i32, i32) {
    %c0_i32 = arith.constant 0 : i32
    %c0_i32_0 = arith.constant 0 : i32
    %c0_i32_1 = arith.constant 0 : i32
    return %c0_i32, %c0_i32_0 : i32, i32
  }
  func.func @transform_7(%arg0: i32) -> (i32, i32) {
    %c0_i32 = arith.constant 0 : i32
    %c0_i32_0 = arith.constant 0 : i32
    %c0_i32_1 = arith.constant 0 : i32
    return %c0_i32, %c0_i32_0 : i32, i32
  }
  func.func @transform_8(%arg0: i32) -> (i32, i32) {
    %c0_i32 = arith.constant 0 : i32
    %c0_i32_0 = arith.constant 0 : i32
    %c0_i32_1 = arith.constant 0 : i32
    return %c0_i32, %c0_i32_0 : i32, i32
  }
  func.func @transform_9(%arg0: i32) -> (i32, i32) {
    %c0_i32 = arith.constant 0 : i32
    %c0_i32_0 = arith.constant 0 : i32
    %c0_i32_1 = arith.constant 0 : i32
    return %c0_i32, %c0_i32_0 : i32, i32
  }
  func.func @transform_10(%arg0: i32) -> (i32, i32) {
    %c0_i32 = arith.constant 0 : i32
    %c0_i32_0 = arith.constant 0 : i32
    %c0_i32_1 = arith.constant 0 : i32
    return %c0_i32, %c0_i32_0 : i32, i32
  }
  func.func @transform_11(%arg0: i32) -> (i32, i32) {
    %c0_i32 = arith.constant 0 : i32
    %c0_i32_0 = arith.constant 0 : i32
    %c0_i32_1 = arith.constant 0 : i32
    return %c0_i32, %c0_i32_0 : i32, i32
  }
  func.func @transform_12(%arg0: i32) -> (i32, i32) {
    %c0_i32 = arith.constant 0 : i32
    %c0_i32_0 = arith.constant 0 : i32
    %c0_i32_1 = arith.constant 0 : i32
    return %c0_i32, %c0_i32_0 : i32, i32
  }
  func.func @transform_13(%arg0: i32) -> (i32, i32) {
    %c0_i32 = arith.constant 0 : i32
    %c0_i32_0 = arith.constant 0 : i32
    %c0_i32_1 = arith.constant 0 : i32
    return %c0_i32, %c0_i32_0 : i32, i32
  }
}

</mosaic_0001>

<llo_original>
// kernel: translation_forward.1
$region0: #{translation_forward.1}
  #allocation0 [shape = 'u32[]', space=smem, size = 0x4, offset = 0x4, fixed_abs, tag = 'smem constant byte address 0x4 - core index']
  #allocation1 [shape = 'u32[144,128]{1,0:T(1,128)}', space=vmem, size = 0x12000, scoped, tag = 'internal scratch']
  %s0 = inlined_call_operand.vmem [shape: f32[16,32], index: 0, kind: input, shape index: {}]
  %s1 = inlined_call_operand.vmem [shape: f32[16,32], index: 1, kind: input, shape index: {}]
  %s2 = inlined_call_operand.vmem [shape: f32[16,1], index: 2, kind: input, shape index: {}]
  %s3 = inlined_call_operand.vmem [shape: f32[16,1], index: 3, kind: input, shape index: {}]
  %s4 = inlined_call_operand.vmem [shape: f32[16,16], index: 4, kind: input, shape index: {}]
  %s5 = inlined_call_operand.vmem [shape: f32[32,32], index: 5, kind: input, shape index: {}]
  %s6 = inlined_call_operand.vmem [shape: f32[1,32], index: 6, kind: input, shape index: {}]
  %s7 = inlined_call_operand.vmem [shape: f32[32,64], index: 7, kind: input, shape index: {}]
  %s8 = inlined_call_operand.vmem [shape: f32[32,64], index: 8, kind: input, shape index: {}]
  %s9 = inlined_call_operand.vmem [shape: f32[32,32], index: 9, kind: input, shape index: {}]
  %s10 = inlined_call_operand.vmem [shape: f32[1,32], index: 10, kind: input, shape index: {}]
  %s11 = inlined_call_operand.vmem [shape: f32[32,128], index: 11, kind: input, shape index: {}]
  %s12 = inlined_call_operand.vmem [shape: f32[1,128], index: 12, kind: input, shape index: {}]
  %s13 = inlined_call_operand.vmem [shape: f32[16,128], index: 13, kind: output, shape index: {}]
  %s14 = sld [smem:[#allocation0]]
  $region62: #{translation_forward.1} parent=0
    _
  %s16 = ssub.s32 1, %s14
  %s17 = scalar_select 0, %s16, %s14
  // Predicated region
  $region2: #{translation_forward.1} parent=0 // pred_check
    _
  $region3: #{translation_forward.1} parent=0 // pred_check_branch
    %19 = sbr.rel (0) target = $region5
  $region4: #{translation_forward.1} parent=0 // pred_region
    _
  $region5: #{translation_forward.1} parent=0 // pred_fallthru
    _
  // Predicated region
  $region6: #{translation_forward.1} parent=0 // pred_check
    _
  $region7: #{translation_forward.1} parent=0 // pred_check_branch
    %21 = sbr.rel (0) target = $region9
  $region8: #{translation_forward.1} parent=0 // pred_region
    _
  $region9: #{translation_forward.1} parent=0 // pred_fallthru
    _
  // Predicated region
  $region10: #{translation_forward.1} parent=0 // pred_check
    _
  $region11: #{translation_forward.1} parent=0 // pred_check_branch
    %23 = sbr.rel (0) target = $region13
  $region12: #{translation_forward.1} parent=0 // pred_region
    _
  $region13: #{translation_forward.1} parent=0 // pred_fallthru
    _
  // Predicated region
  $region14: #{translation_forward.1} parent=0 // pred_check
    _
  $region15: #{translation_forward.1} parent=0 // pred_check_branch
    %25 = sbr.rel (0) target = $region17
  $region16: #{translation_forward.1} parent=0 // pred_region
    _
  $region17: #{translation_forward.1} parent=0 // pred_fallthru
    _
  // Predicated region
  $region18: #{translation_forward.1} parent=0 // pred_check
    _
  $region19: #{translation_forward.1} parent=0 // pred_check_branch
    %27 = sbr.rel (0) target = $region21
  $region20: #{translation_forward.1} parent=0 // pred_region
    _
  $region21: #{translation_forward.1} parent=0 // pred_fallthru
    _
  // Predicated region
  $region22: #{translation_forward.1} parent=0 // pred_check
    _
  $region23: #{translation_forward.1} parent=0 // pred_check_branch
    %29 = sbr.rel (0) target = $region25
  $region24: #{translation_forward.1} parent=0 // pred_region
    _
  $region25: #{translation_forward.1} parent=0 // pred_fallthru
    _
  // Predicated region
  $region26: #{translation_forward.1} parent=0 // pred_check
    _
  $region27: #{translation_forward.1} parent=0 // pred_check_branch
    %31 = sbr.rel (0) target = $region29
  $region28: #{translation_forward.1} parent=0 // pred_region
    _
  $region29: #{translation_forward.1} parent=0 // pred_fallthru
    _
  // Predicated region
  $region30: #{translation_forward.1} parent=0 // pred_check
    _
  $region31: #{translation_forward.1} parent=0 // pred_check_branch
    %33 = sbr.rel (0) target = $region33
  $region32: #{translation_forward.1} parent=0 // pred_region
    _
  $region33: #{translation_forward.1} parent=0 // pred_fallthru
    _
  // Predicated region
  $region34: #{translation_forward.1} parent=0 // pred_check
    _
  $region35: #{translation_forward.1} parent=0 // pred_check_branch
    %35 = sbr.rel (0) target = $region37
  $region36: #{translation_forward.1} parent=0 // pred_region
    _
  $region37: #{translation_forward.1} parent=0 // pred_fallthru
    _
  // Predicated region
  $region38: #{translation_forward.1} parent=0 // pred_check
    _
  $region39: #{translation_forward.1} parent=0 // pred_check_branch
    %37 = sbr.rel (0) target = $region41
  $region40: #{translation_forward.1} parent=0 // pred_region
    _
  $region41: #{translation_forward.1} parent=0 // pred_fallthru
    _
  // Predicated region
  $region42: #{translation_forward.1} parent=0 // pred_check
    _
  $region43: #{translation_forward.1} parent=0 // pred_check_branch
    %39 = sbr.rel (0) target = $region45
  $region44: #{translation_forward.1} parent=0 // pred_region
    _
  $region45: #{translation_forward.1} parent=0 // pred_fallthru
    _
  // Predicated region
  $region46: #{translation_forward.1} parent=0 // pred_check
    _
  $region47: #{translation_forward.1} parent=0 // pred_check_branch
    %41 = sbr.rel (0) target = $region49
  $region48: #{translation_forward.1} parent=0 // pred_region
    _
  $region49: #{translation_forward.1} parent=0 // pred_fallthru
    _
  // Predicated region
  $region50: #{translation_forward.1} parent=0 // pred_check
    _
  $region51: #{translation_forward.1} parent=0 // pred_check_branch
    %43 = sbr.rel (0) target = $region53
  $region52: #{translation_forward.1} parent=0 // pred_region
    _
  $region53: #{translation_forward.1} parent=0 // pred_fallthru
    _
  %v44 = vld [vmem:[%s0] sm:$0xff]
  %v45 = vld [vmem:[%s0 + $0x8] sm:$0xff]
  %v46 = vld [vmem:[%s1] sm:$0xff]
  %v47 = vld [vmem:[%s1 + $0x8] sm:$0xff]
  %v48 = vld [vmem:[%s5] sm:$0xff]
  %v49 = vld [vmem:[%s5 + $0x8] sm:$0xff]
  %v50 = vld [vmem:[%s5 + $0x10] sm:$0xff]
  %v51 = vld [vmem:[%s5 + $0x18] sm:$0xff]
  %v52 = vld [vmem:[%s6] sm:$0x1]
  %v54 = vlaneseq
  %v55 = vshrl.u32 %v54, 7
  %v56 = vsub.s32 0, %v55
  %v57 = vrot.slane %v52, %v56
  %vm59 = vcmask 261120
  %v61 = vsel %vm59, %v44, 0
  %v64 = vsel %vm59, %v45, 0
  %66 = vmatprep.subr.mxu0 0.0
  %67 = vmatpush1.msra.mxu0 %v48
  %68 = vmatprep.subr.mxu0 0.0
  %69 = vmatpush1.msra.mxu0 %v49
  %70 = vmatprep.subr.mxu0 0.0
  %71 = vmatpush1.msra.mxu0 %v50
  %72 = vmatprep.subr.mxu0 0.0
  %73 = vmatpush1.msra.mxu0 %v51
  %74 = vmatprep.subr.mxu0 0.0
  %75 = vmatpush1.msra.mxu0 0.0
  %76 = vmatprep.subr.mxu0 0.0
  %77 = vmatpush1.msra.mxu0 0.0
  %78 = vmatprep.subr.mxu0 0.0
  %79 = vmatpush1.msra.mxu0 0.0
  %80 = vmatprep.subr.mxu0 0.0
  %81 = vmatpush1.msra.mxu0 0.0
  %82 = vmatprep.subr.mxu0 0.0
  %83 = vmatpush1.msra.mxu0 0.0
  %84 = vmatprep.subr.mxu0 0.0
  %85 = vmatpush1.msra.mxu0 0.0
  %86 = vmatprep.subr.mxu0 0.0
  %87 = vmatpush1.msra.mxu0 0.0
  %88 = vmatprep.subr.mxu0 0.0
  %89 = vmatpush1.msra.mxu0 0.0
  %90 = vmatprep.subr.mxu0 0.0
  %91 = vmatpush1.msra.mxu0 0.0
  %92 = vmatprep.subr.mxu0 0.0
  %93 = vmatpush1.msra.mxu0 0.0
  %94 = vmatprep.subr.mxu0 0.0
  %95 = vmatpush1.msra.mxu0 0.0
  %96 = vmatprep.subr.mxu0 0.0
  %97 = vmatpush1.msra.mxu0 0.0
  %98 = vmatprep.subr.mxu0 0.0
  %99 = vmatpush1.msra.mxu0 0.0
  %100 = vmatprep.subr.mxu0 0.0
  %101 = vmatpush1.msra.mxu0 0.0
  %102 = vmatprep.subr.mxu0 0.0
  %103 = vmatpush1.msra.mxu0 0.0
  %104 = vmatprep.subr.mxu0 0.0
  %105 = vmatpush1.msra.mxu0 0.0
  %106 = vmatprep.subr.mxu0 0.0
  %107 = vmatpush1.msra.mxu0 0.0
  %108 = vmatprep.subr.mxu0 0.0
  %109 = vmatpush1.msra.mxu0 0.0
  %110 = vmatprep.subr.mxu0 0.0
  %111 = vmatpush1.msra.mxu0 0.0
  %112 = vmatprep.subr.mxu0 0.0
  %113 = vmatpush1.msra.mxu0 0.0
  %114 = vmatprep.subr.mxu0 0.0
  %115 = vmatpush1.msra.mxu0 0.0
  %116 = vmatprep.subr.mxu0 0.0
  %117 = vmatpush1.msra.mxu0 0.0
  %118 = vmatprep.subr.mxu0 0.0
  %119 = vmatpush1.msra.mxu0 0.0
  %120 = vmatprep.subr.mxu0 0.0
  %121 = vmatpush1.msra.mxu0 0.0
  %122 = vmatprep.subr.mxu0 0.0
  %123 = vmatpush1.msra.mxu0 0.0
  %124 = vmatprep.subr.mxu0 0.0
  %125 = vmatpush1.msra.mxu0 0.0
  %126 = vmatprep.subr.mxu0 0.0
  %127 = vmatpush1.msra.mxu0 0.0
  %128 = vmatprep.subr.mxu0 0.0
  %129 = vmatpush1.msra.mxu0 0.0
  %130 = vmatprep.mubr.f32.mxu0 0.0
  %131 = vmatmul.mubr.f32.gmra.mrb[0].mxu0 %v61
  %v132 = vpop.f32.mrb[0].mxu0
  %v133 = vadd.f32 %v57, %v132
  %v134 = vpop.f32.mrb[0].mxu0
  %135 = vmatprep.mubr.f32.mxu0 0.0
  %136 = vmatmul.mubr.f32.gmra.mrb[0].mxu0 %v64
  %v137 = vpop.f32.mrb[0].mxu0
  %v138 = vadd.f32 %v57, %v137
  %v139 = vpop.f32.mrb[0].mxu0
  %140 = vdwg.mxu0
  %v141 = vtanh.pop %v133
  %v142 = vtanh.pop %v138
  %v143 = vld [vmem:[%s2] sm:$0xff]
  %v144 = vld [vmem:[%s2 + $0x8] sm:$0xff]
  %146 = vset.pattern.permute.xlu0 0
  %147 = vperm.xlu0 %146, %v143
  %v148 = vpop.permute.xlu0 %147
  %151 = vset.pattern.permute.xlu0 0
  %152 = vperm.xlu0 %151, %v144
  %v153 = vpop.permute.xlu0 %152
  %v155 = vmul.f32 %v141, %v148
  %v156 = vmul.f32 %v142, %v153
  %v157 = vld [vmem:[%s7] sm:$0xff]
  %v158 = vld [vmem:[%s7 + $0x8] sm:$0xff]
  %v159 = vld [vmem:[%s7 + $0x10] sm:$0xff]
  %v160 = vld [vmem:[%s7 + $0x18] sm:$0xff]
  %v162 = vsel %vm59, %v46, 0
  %v165 = vsel %vm59, %v47, 0
  %167 = vmatprep.subr.mxu0 0.0
  %168 = vmatpush1.msra.mxu0 %v157
  %169 = vmatprep.subr.mxu0 0.0
  %170 = vmatpush1.msra.mxu0 %v158
  %171 = vmatprep.subr.mxu0 0.0
  %172 = vmatpush1.msra.mxu0 %v159
  %173 = vmatprep.subr.mxu0 0.0
  %174 = vmatpush1.msra.mxu0 %v160
  %175 = vmatprep.subr.mxu0 0.0
  %176 = vmatpush1.msra.mxu0 0.0
  %177 = vmatprep.subr.mxu0 0.0
  %178 = vmatpush1.msra.mxu0 0.0
  %179 = vmatprep.subr.mxu0 0.0
  %180 = vmatpush1.msra.mxu0 0.0
  %181 = vmatprep.subr.mxu0 0.0
  %182 = vmatpush1.msra.mxu0 0.0
  %183 = vmatprep.subr.mxu0 0.0
  %184 = vmatpush1.msra.mxu0 0.0
  %185 = vmatprep.subr.mxu0 0.0
  %186 = vmatpush1.msra.mxu0 0.0
  %187 = vmatprep.subr.mxu0 0.0
  %188 = vmatpush1.msra.mxu0 0.0
  %189 = vmatprep.subr.mxu0 0.0
  %190 = vmatpush1.msra.mxu0 0.0
  %191 = vmatprep.subr.mxu0 0.0
  %192 = vmatpush1.msra.mxu0 0.0
  %193 = vmatprep.subr.mxu0 0.0
  %194 = vmatpush1.msra.mxu0 0.0
  %195 = vmatprep.subr.mxu0 0.0
  %196 = vmatpush1.msra.mxu0 0.0
  %197 = vmatprep.subr.mxu0 0.0
  %198 = vmatpush1.msra.mxu0 0.0
  %199 = vmatprep.subr.mxu0 0.0
  %200 = vmatpush1.msra.mxu0 0.0
  %201 = vmatprep.subr.mxu0 0.0
  %202 = vmatpush1.msra.mxu0 0.0
  %203 = vmatprep.subr.mxu0 0.0
  %204 = vmatpush1.msra.mxu0 0.0
  %205 = vmatprep.subr.mxu0 0.0
  %206 = vmatpush1.msra.mxu0 0.0
  %207 = vmatprep.subr.mxu0 0.0
  %208 = vmatpush1.msra.mxu0 0.0
  %209 = vmatprep.subr.mxu0 0.0
  %210 = vmatpush1.msra.mxu0 0.0
  %211 = vmatprep.subr.mxu0 0.0
  %212 = vmatpush1.msra.mxu0 0.0
  %213 = vmatprep.subr.mxu0 0.0
  %214 = vmatpush1.msra.mxu0 0.0
  %215 = vmatprep.subr.mxu0 0.0
  %216 = vmatpush1.msra.mxu0 0.0
  %217 = vmatprep.subr.mxu0 0.0
  %218 = vmatpush1.msra.mxu0 0.0
  %219 = vmatprep.subr.mxu0 0.0
  %220 = vmatpush1.msra.mxu0 0.0
  %221 = vmatprep.subr.mxu0 0.0
  %222 = vmatpush1.msra.mxu0 0.0
  %223 = vmatprep.subr.mxu0 0.0
  %224 = vmatpush1.msra.mxu0 0.0
  %225 = vmatprep.subr.mxu0 0.0
  %226 = vmatpush1.msra.mxu0 0.0
  %227 = vmatprep.subr.mxu0 0.0
  %228 = vmatpush1.msra.mxu0 0.0
  %229 = vmatprep.subr.mxu0 0.0
  %230 = vmatpush1.msra.mxu0 0.0
  %231 = vmatprep.mubr.f32.mxu0 0.0
  %232 = vmatmul.mubr.f32.gmra.mrb[0].mxu0 %v162
  %v233 = vpop.f32.mrb[0].mxu0
  %v234 = vadd.f32 0.0, %v233
  %v235 = vpop.f32.mrb[0].mxu0
  %236 = vmatprep.mubr.f32.mxu0 0.0
  %237 = vmatmul.mubr.f32.gmra.mrb[0].mxu0 %v165
  %v238 = vpop.f32.mrb[0].mxu0
  %v239 = vadd.f32 0.0, %v238
  %v240 = vpop.f32.mrb[0].mxu0
  %241 = vdwg.mxu0
  %v242 = vld [vmem:[%s8] sm:$0xff]
  %v243 = vld [vmem:[%s8 + $0x8] sm:$0xff]
  %v244 = vld [vmem:[%s8 + $0x10] sm:$0xff]
  %v245 = vld [vmem:[%s8 + $0x18] sm:$0xff]
  %v247 = vsel %vm59, %v155, 0
  %v250 = vsel %vm59, %v156, 0
  %252 = vmatprep.subr.mxu0 0.0
  %253 = vmatpush1.msra.mxu0 %v242
  %254 = vmatprep.subr.mxu0 0.0
  %255 = vmatpush1.msra.mxu0 %v243
  %256 = vmatprep.subr.mxu0 0.0
  %257 = vmatpush1.msra.mxu0 %v244
  %258 = vmatprep.subr.mxu0 0.0
  %259 = vmatpush1.msra.mxu0 %v245
  %260 = vmatprep.subr.mxu0 0.0
  %261 = vmatpush1.msra.mxu0 0.0
  %262 = vmatprep.subr.mxu0 0.0
  %263 = vmatpush1.msra.mxu0 0.0
  %264 = vmatprep.subr.mxu0 0.0
  %265 = vmatpush1.msra.mxu0 0.0
  %266 = vmatprep.subr.mxu0 0.0
  %267 = vmatpush1.msra.mxu0 0.0
  %268 = vmatprep.subr.mxu0 0.0
  %269 = vmatpush1.msra.mxu0 0.0
  %270 = vmatprep.subr.mxu0 0.0
  %271 = vmatpush1.msra.mxu0 0.0
  %272 = vmatprep.subr.mxu0 0.0
  %273 = vmatpush1.msra.mxu0 0.0
  %274 = vmatprep.subr.mxu0 0.0
  %275 = vmatpush1.msra.mxu0 0.0
  %276 = vmatprep.subr.mxu0 0.0
  %277 = vmatpush1.msra.mxu0 0.0
  %278 = vmatprep.subr.mxu0 0.0
  %279 = vmatpush1.msra.mxu0 0.0
  %280 = vmatprep.subr.mxu0 0.0
  %281 = vmatpush1.msra.mxu0 0.0
  %282 = vmatprep.subr.mxu0 0.0
  %283 = vmatpush1.msra.mxu0 0.0
  %284 = vmatprep.subr.mxu0 0.0
  %285 = vmatpush1.msra.mxu0 0.0
  %286 = vmatprep.subr.mxu0 0.0
  %287 = vmatpush1.msra.mxu0 0.0
  %288 = vmatprep.subr.mxu0 0.0
  %289 = vmatpush1.msra.mxu0 0.0
  %290 = vmatprep.subr.mxu0 0.0
  %291 = vmatpush1.msra.mxu0 0.0
  %292 = vmatprep.subr.mxu0 0.0
  %293 = vmatpush1.msra.mxu0 0.0
  %294 = vmatprep.subr.mxu0 0.0
  %295 = vmatpush1.msra.mxu0 0.0
  %296 = vmatprep.subr.mxu0 0.0
  %297 = vmatpush1.msra.mxu0 0.0
  %298 = vmatprep.subr.mxu0 0.0
  %299 = vmatpush1.msra.mxu0 0.0
  %300 = vmatprep.subr.mxu0 0.0
  %301 = vmatpush1.msra.mxu0 0.0
  %302 = vmatprep.subr.mxu0 0.0
  %303 = vmatpush1.msra.mxu0 0.0
  %304 = vmatprep.subr.mxu0 0.0
  %305 = vmatpush1.msra.mxu0 0.0
  %306 = vmatprep.subr.mxu0 0.0
  %307 = vmatpush1.msra.mxu0 0.0
  %308 = vmatprep.subr.mxu0 0.0
  %309 = vmatpush1.msra.mxu0 0.0
  %310 = vmatprep.subr.mxu0 0.0
  %311 = vmatpush1.msra.mxu0 0.0
  %312 = vmatprep.subr.mxu0 0.0
  %313 = vmatpush1.msra.mxu0 0.0
  %314 = vmatprep.subr.mxu0 0.0
  %315 = vmatpush1.msra.mxu0 0.0
  %316 = vmatprep.mubr.f32.mxu0 0.0
  %317 = vmatmul.mubr.f32.gmra.mrb[0].mxu0 %v247
  %v318 = vpop.f32.mrb[0].mxu0
  %v319 = vadd.f32 0.0, %v318
  %v320 = vpop.f32.mrb[0].mxu0
  %321 = vmatprep.mubr.f32.mxu0 0.0
  %322 = vmatmul.mubr.f32.gmra.mrb[0].mxu0 %v250
  %v323 = vpop.f32.mrb[0].mxu0
  %v324 = vadd.f32 0.0, %v323
  %v325 = vpop.f32.mrb[0].mxu0
  %326 = vdwg.mxu0
  %v328 = vsel %vm59, %v234, 0
  %v331 = vsel %vm59, %v239, 0
  %v334 = vsel %vm59, %v319, 0
  %v337 = vsel %vm59, %v324, 0
  %339 = vmatprep.subr.mxu0 0.0
  %340 = vmatpush1.xpose.msra.mxu0 %v334
  %341 = vmatprep.subr.mxu0 0.0
  %342 = vmatpush1.xpose.msra.mxu0 %v337
  %343 = vmatprep.subr.mxu0 0.0
  %344 = vmatpush1.xpose.msra.mxu0 0.0
  %345 = vmatprep.subr.mxu0 0.0
  %346 = vmatpush1.xpose.msra.mxu0 0.0
  %347 = vmatprep.subr.mxu0 0.0
  %348 = vmatpush1.xpose.msra.mxu0 0.0
  %349 = vmatprep.subr.mxu0 0.0
  %350 = vmatpush1.xpose.msra.mxu0 0.0
  %351 = vmatprep.subr.mxu0 0.0
  %352 = vmatpush1.xpose.msra.mxu0 0.0
  %353 = vmatprep.subr.mxu0 0.0
  %354 = vmatpush1.xpose.msra.mxu0 0.0
  %355 = vmatprep.subr.mxu0 0.0
  %356 = vmatpush1.xpose.msra.mxu0 0.0
  %357 = vmatprep.subr.mxu0 0.0
  %358 = vmatpush1.xpose.msra.mxu0 0.0
  %359 = vmatprep.subr.mxu0 0.0
  %360 = vmatpush1.xpose.msra.mxu0 0.0
  %361 = vmatprep.subr.mxu0 0.0
  %362 = vmatpush1.xpose.msra.mxu0 0.0
  %363 = vmatprep.subr.mxu0 0.0
  %364 = vmatpush1.xpose.msra.mxu0 0.0
  %365 = vmatprep.subr.mxu0 0.0
  %366 = vmatpush1.xpose.msra.mxu0 0.0
  %367 = vmatprep.subr.mxu0 0.0
  %368 = vmatpush1.xpose.msra.mxu0 0.0
  %369 = vmatprep.subr.mxu0 0.0
  %370 = vmatpush1.xpose.msra.mxu0 0.0
  %371 = vmatprep.subr.mxu0 0.0
  %372 = vmatpush1.xpose.msra.mxu0 0.0
  %373 = vmatprep.subr.mxu0 0.0
  %374 = vmatpush1.xpose.msra.mxu0 0.0
  %375 = vmatprep.subr.mxu0 0.0
  %376 = vmatpush1.xpose.msra.mxu0 0.0
  %377 = vmatprep.subr.mxu0 0.0
  %378 = vmatpush1.xpose.msra.mxu0 0.0
  %379 = vmatprep.subr.mxu0 0.0
  %380 = vmatpush1.xpose.msra.mxu0 0.0
  %381 = vmatprep.subr.mxu0 0.0
  %382 = vmatpush1.xpose.msra.mxu0 0.0
  %383 = vmatprep.subr.mxu0 0.0
  %384 = vmatpush1.xpose.msra.mxu0 0.0
  %385 = vmatprep.subr.mxu0 0.0
  %386 = vmatpush1.xpose.msra.mxu0 0.0
  %387 = vmatprep.subr.mxu0 0.0
  %388 = vmatpush1.xpose.msra.mxu0 0.0
  %389 = vmatprep.subr.mxu0 0.0
  %390 = vmatpush1.xpose.msra.mxu0 0.0
  %391 = vmatprep.subr.mxu0 0.0
  %392 = vmatpush1.xpose.msra.mxu0 0.0
  %393 = vmatprep.subr.mxu0 0.0
  %394 = vmatpush1.xpose.msra.mxu0 0.0
  %395 = vmatprep.subr.mxu0 0.0
  %396 = vmatpush1.xpose.msra.mxu0 0.0
  %397 = vmatprep.subr.mxu0 0.0
  %398 = vmatpush1.xpose.msra.mxu0 0.0
  %399 = vmatprep.subr.mxu0 0.0
  %400 = vmatpush1.xpose.msra.mxu0 0.0
  %401 = vmatprep.subr.mxu0 0.0
  %402 = vmatpush1.xpose.msra.mxu0 0.0
  %403 = vmatprep.mubr.f32.mxu0 0.0
  %404 = vmatmul.mubr.f32.gmra.mrb[0].mxu0 %v328
  %v405 = vpop.f32.mrb[0].mxu0
  %v406 = vadd.f32 0.0, %v405
  %v407 = vpop.f32.mrb[0].mxu0
  %408 = vmatprep.mubr.f32.mxu0 0.0
  %409 = vmatmul.mubr.f32.gmra.mrb[0].mxu0 %v331
  %v410 = vpop.f32.mrb[0].mxu0
  %v411 = vadd.f32 0.0, %v410
  %v412 = vpop.f32.mrb[0].mxu0
  %413 = vdwg.mxu0
  %v414 = vmul.f32 %v406, 0.17677669
  %v415 = vmul.f32 %v411, 0.17677669
  %v416 = vld [vmem:[%s4] sm:$0xff]
  %v417 = vld [vmem:[%s4 + $0x8] sm:$0xff]
  %v418 = vadd.f32 %v414, %v416
  %v419 = vadd.f32 %v415, %v417
  %vm420 = vcmask 130048
  %v421 = vsel %vm420, %v418, -inf
  %422 = vmax.xlane.f32.xlu0 %v421
  %v423 = vpop.xlane.xlu0 %422
  %v424 = vsel %vm420, %v419, -inf
  %425 = vmax.xlane.f32.xlu0 %v424
  %v426 = vpop.xlane.xlu0 %425
  %v427 = vsub.f32 %v418, %v423
  %v428 = vsub.f32 %v419, %v426
  %v429 = vmul.f32 %v427, 1.442695
  %v430 = vpow.pop %v429
  %v431 = vmul.f32 %v428, 1.442695
  %v432 = vpow.pop %v431
  %v433 = vsel %vm420, %v430, 0.0
  %434 = vadd.xlane.f32.xlu0 %v433
  %v435 = vpop.xlane.xlu0 %434
  %v436 = vsel %vm420, %v432, 0.0
  %437 = vadd.xlane.f32.xlu0 %v436
  %v438 = vpop.xlane.xlu0 %437
  %v439 = vrcp.pop %v435
  %v440 = vrcp.pop %v438
  %v441 = vmul.f32 %v430, %v439
  %v442 = vmul.f32 %v432, %v440
  %443 = vrot.lane.b32.xlu0 %v319, 96
  %v444 = vpop.permute.xlu0 %443
  %445 = vrot.lane.b32.xlu0 %v324, 96
  %v446 = vpop.permute.xlu0 %445
  %v450 = vsel %vm420, %v441, 0
  %v453 = vsel %vm420, %v442, 0
  %455 = vmatprep.subr.mxu0 0.0
  %456 = vmatpush1.msra.mxu0 %v444
  %457 = vmatprep.subr.mxu0 0.0
  %458 = vmatpush1.msra.mxu0 %v446
  %459 = vmatprep.subr.mxu0 0.0
  %460 = vmatpush1.msra.mxu0 0.0
  %461 = vmatprep.subr.mxu0 0.0
  %462 = vmatpush1.msra.mxu0 0.0
  %463 = vmatprep.subr.mxu0 0.0
  %464 = vmatpush1.msra.mxu0 0.0
  %465 = vmatprep.subr.mxu0 0.0
  %466 = vmatpush1.msra.mxu0 0.0
  %467 = vmatprep.subr.mxu0 0.0
  %468 = vmatpush1.msra.mxu0 0.0
  %469 = vmatprep.subr.mxu0 0.0
  %470 = vmatpush1.msra.mxu0 0.0
  %471 = vmatprep.subr.mxu0 0.0
  %472 = vmatpush1.msra.mxu0 0.0
  %473 = vmatprep.subr.mxu0 0.0
  %474 = vmatpush1.msra.mxu0 0.0
  %475 = vmatprep.subr.mxu0 0.0
  %476 = vmatpush1.msra.mxu0 0.0
  %477 = vmatprep.subr.mxu0 0.0
  %478 = vmatpush1.msra.mxu0 0.0
  %479 = vmatprep.subr.mxu0 0.0
  %480 = vmatpush1.msra.mxu0 0.0
  %481 = vmatprep.subr.mxu0 0.0
  %482 = vmatpush1.msra.mxu0 0.0
  %483 = vmatprep.subr.mxu0 0.0
  %484 = vmatpush1.msra.mxu0 0.0
  %485 = vmatprep.subr.mxu0 0.0
  %486 = vmatpush1.msra.mxu0 0.0
  %487 = vmatprep.subr.mxu0 0.0
  %488 = vmatpush1.msra.mxu0 0.0
  %489 = vmatprep.subr.mxu0 0.0
  %490 = vmatpush1.msra.mxu0 0.0
  %491 = vmatprep.subr.mxu0 0.0
  %492 = vmatpush1.msra.mxu0 0.0
  %493 = vmatprep.subr.mxu0 0.0
  %494 = vmatpush1.msra.mxu0 0.0
  %495 = vmatprep.subr.mxu0 0.0
  %496 = vmatpush1.msra.mxu0 0.0
  %497 = vmatprep.subr.mxu0 0.0
  %498 = vmatpush1.msra.mxu0 0.0
  %499 = vmatprep.subr.mxu0 0.0
  %500 = vmatpush1.msra.mxu0 0.0
  %501 = vmatprep.subr.mxu0 0.0
  %502 = vmatpush1.msra.mxu0 0.0
  %503 = vmatprep.subr.mxu0 0.0
  %504 = vmatpush1.msra.mxu0 0.0
  %505 = vmatprep.subr.mxu0 0.0
  %506 = vmatpush1.msra.mxu0 0.0
  %507 = vmatprep.subr.mxu0 0.0
  %508 = vmatpush1.msra.mxu0 0.0
  %509 = vmatprep.subr.mxu0 0.0
  %510 = vmatpush1.msra.mxu0 0.0
  %511 = vmatprep.subr.mxu0 0.0
  %512 = vmatpush1.msra.mxu0 0.0
  %513 = vmatprep.subr.mxu0 0.0
  %514 = vmatpush1.msra.mxu0 0.0
  %515 = vmatprep.subr.mxu0 0.0
  %516 = vmatpush1.msra.mxu0 0.0
  %517 = vmatprep.subr.mxu0 0.0
  %518 = vmatpush1.msra.mxu0 0.0
  %519 = vmatprep.mubr.f32.mxu0 0.0
  %520 = vmatmul.mubr.f32.gmra.mrb[0].mxu0 %v450
  %v521 = vpop.f32.mrb[0].mxu0
  %v522 = vadd.f32 0.0, %v521
  %v523 = vpop.f32.mrb[0].mxu0
  %524 = vmatprep.mubr.f32.mxu0 0.0
  %525 = vmatmul.mubr.f32.gmra.mrb[0].mxu0 %v453
  %v526 = vpop.f32.mrb[0].mxu0
  %v527 = vadd.f32 0.0, %v526
  %v528 = vpop.f32.mrb[0].mxu0
  %529 = vdwg.mxu0
  %v530 = vld [vmem:[%s9] sm:$0xff]
  %v531 = vld [vmem:[%s9 + $0x8] sm:$0xff]
  %v532 = vld [vmem:[%s9 + $0x10] sm:$0xff]
  %v533 = vld [vmem:[%s9 + $0x18] sm:$0xff]
  %v535 = vsel %vm59, %v522, 0
  %v538 = vsel %vm59, %v527, 0
  %540 = vmatprep.subr.mxu0 0.0
  %541 = vmatpush1.msra.mxu0 %v530
  %542 = vmatprep.subr.mxu0 0.0
  %543 = vmatpush1.msra.mxu0 %v531
  %544 = vmatprep.subr.mxu0 0.0
  %545 = vmatpush1.msra.mxu0 %v532
  %546 = vmatprep.subr.mxu0 0.0
  %547 = vmatpush1.msra.mxu0 %v533
  %548 = vmatprep.subr.mxu0 0.0
  %549 = vmatpush1.msra.mxu0 0.0
  %550 = vmatprep.subr.mxu0 0.0
  %551 = vmatpush1.msra.mxu0 0.0
  %552 = vmatprep.subr.mxu0 0.0
  %553 = vmatpush1.msra.mxu0 0.0
  %554 = vmatprep.subr.mxu0 0.0
  %555 = vmatpush1.msra.mxu0 0.0
  %556 = vmatprep.subr.mxu0 0.0
  %557 = vmatpush1.msra.mxu0 0.0
  %558 = vmatprep.subr.mxu0 0.0
  %559 = vmatpush1.msra.mxu0 0.0
  %560 = vmatprep.subr.mxu0 0.0
  %561 = vmatpush1.msra.mxu0 0.0
  %562 = vmatprep.subr.mxu0 0.0
  %563 = vmatpush1.msra.mxu0 0.0
  %564 = vmatprep.subr.mxu0 0.0
  %565 = vmatpush1.msra.mxu0 0.0
  %566 = vmatprep.subr.mxu0 0.0
  %567 = vmatpush1.msra.mxu0 0.0
  %568 = vmatprep.subr.mxu0 0.0
  %569 = vmatpush1.msra.mxu0 0.0
  %570 = vmatprep.subr.mxu0 0.0
  %571 = vmatpush1.msra.mxu0 0.0
  %572 = vmatprep.subr.mxu0 0.0
  %573 = vmatpush1.msra.mxu0 0.0
  %574 = vmatprep.subr.mxu0 0.0
  %575 = vmatpush1.msra.mxu0 0.0
  %576 = vmatprep.subr.mxu0 0.0
  %577 = vmatpush1.msra.mxu0 0.0
  %578 = vmatprep.subr.mxu0 0.0
  %579 = vmatpush1.msra.mxu0 0.0
  %580 = vmatprep.subr.mxu0 0.0
  %581 = vmatpush1.msra.mxu0 0.0
  %582 = vmatprep.subr.mxu0 0.0
  %583 = vmatpush1.msra.mxu0 0.0
  %584 = vmatprep.subr.mxu0 0.0
  %585 = vmatpush1.msra.mxu0 0.0
  %586 = vmatprep.subr.mxu0 0.0
  %587 = vmatpush1.msra.mxu0 0.0
  %588 = vmatprep.subr.mxu0 0.0
  %589 = vmatpush1.msra.mxu0 0.0
  %590 = vmatprep.subr.mxu0 0.0
  %591 = vmatpush1.msra.mxu0 0.0
  %592 = vmatprep.subr.mxu0 0.0
  %593 = vmatpush1.msra.mxu0 0.0
  %594 = vmatprep.subr.mxu0 0.0
  %595 = vmatpush1.msra.mxu0 0.0
  %596 = vmatprep.subr.mxu0 0.0
  %597 = vmatpush1.msra.mxu0 0.0
  %598 = vmatprep.subr.mxu0 0.0
  %599 = vmatpush1.msra.mxu0 0.0
  %600 = vmatprep.subr.mxu0 0.0
  %601 = vmatpush1.msra.mxu0 0.0
  %602 = vmatprep.subr.mxu0 0.0
  %603 = vmatpush1.msra.mxu0 0.0
  %604 = vmatprep.mubr.f32.mxu0 0.0
  %605 = vmatmul.mubr.f32.gmra.mrb[0].mxu0 %v535
  %v606 = vpop.f32.mrb[0].mxu0
  %v607 = vadd.f32 0.0, %v606
  %v608 = vpop.f32.mrb[0].mxu0
  %609 = vmatprep.mubr.f32.mxu0 0.0
  %610 = vmatmul.mubr.f32.gmra.mrb[0].mxu0 %v538
  %v611 = vpop.f32.mrb[0].mxu0
  %v612 = vadd.f32 0.0, %v611
  %v613 = vpop.f32.mrb[0].mxu0
  %614 = vdwg.mxu0
  %617 = vrot.lane.b32.xlu0 %v607, 32
  %v618 = vpop.permute.xlu0 %617
  %619 = vrot.lane.b32.xlu0 %v612, 32
  %v620 = vpop.permute.xlu0 %619
  %v623 = vadd.f32 %v234, %v618
  %v624 = vadd.f32 %v239, %v620
  %v625 = vld [vmem:[%s10] sm:$0x1]
  %v627 = vlaneseq
  %v628 = vshrl.u32 %v627, 7
  %v629 = vsub.s32 0, %v628
  %v630 = vrot.slane %v625, %v629
  %631 = vrot.lane.b32.xlu0 %v630, 32
  %v632 = vpop.permute.xlu0 %631
  %v634 = vadd.f32 %v623, %v632
  %v635 = vadd.f32 %v624, %v632
  %v636 = vtanh.pop %v634
  %v637 = vtanh.pop %v635
  %v638 = vld [vmem:[%s3] sm:$0xff]
  %v639 = vld [vmem:[%s3 + $0x8] sm:$0xff]
  %641 = vset.pattern.permute.xlu0 0
  %642 = vperm.xlu0 %641, %v638
  %v643 = vpop.permute.xlu0 %642
  %646 = vset.pattern.permute.xlu0 0
  %647 = vperm.xlu0 %646, %v639
  %v648 = vpop.permute.xlu0 %647
  %v650 = vmul.f32 %v636, %v643
  %v651 = vmul.f32 %v637, %v648
  %v652 = vld [vmem:[%s11] sm:$0xff]
  %v653 = vld [vmem:[%s11 + $0x8] sm:$0xff]
  %v654 = vld [vmem:[%s11 + $0x10] sm:$0xff]
  %v655 = vld [vmem:[%s11 + $0x18] sm:$0xff]
  %v656 = vld [vmem:[%s12] sm:$0x1]
  %v658 = vlaneseq
  %v659 = vshrl.u32 %v658, 7
  %v660 = vsub.s32 0, %v659
  %v661 = vrot.slane %v656, %v660
  %665 = vrot.lane.b32.xlu0 %v650, 96
  %v666 = vpop.permute.xlu0 %665
  %667 = vrot.lane.b32.xlu0 %v651, 96
  %v668 = vpop.permute.xlu0 %667
  %v669 = vsel %vm59, %v666, 0
  %v671 = vsel %vm59, %v668, 0
  %673 = vmatprep.subr.mxu0 0.0
  %674 = vmatpush1.msra.mxu0 %v652
  %675 = vmatprep.subr.mxu0 0.0
  %676 = vmatpush1.msra.mxu0 %v653
  %677 = vmatprep.subr.mxu0 0.0
  %678 = vmatpush1.msra.mxu0 %v654
  %679 = vmatprep.subr.mxu0 0.0
  %680 = vmatpush1.msra.mxu0 %v655
  %681 = vmatprep.subr.mxu0 0.0
  %682 = vmatpush1.msra.mxu0 0.0
  %683 = vmatprep.subr.mxu0 0.0
  %684 = vmatpush1.msra.mxu0 0.0
  %685 = vmatprep.subr.mxu0 0.0
  %686 = vmatpush1.msra.mxu0 0.0
  %687 = vmatprep.subr.mxu0 0.0
  %688 = vmatpush1.msra.mxu0 0.0
  %689 = vmatprep.subr.mxu0 0.0
  %690 = vmatpush1.msra.mxu0 0.0
  %691 = vmatprep.subr.mxu0 0.0
  %692 = vmatpush1.msra.mxu0 0.0
  %693 = vmatprep.subr.mxu0 0.0
  %694 = vmatpush1.msra.mxu0 0.0
  %695 = vmatprep.subr.mxu0 0.0
  %696 = vmatpush1.msra.mxu0 0.0
  %697 = vmatprep.subr.mxu0 0.0
  %698 = vmatpush1.msra.mxu0 0.0
  %699 = vmatprep.subr.mxu0 0.0
  %700 = vmatpush1.msra.mxu0 0.0
  %701 = vmatprep.subr.mxu0 0.0
  %702 = vmatpush1.msra.mxu0 0.0
  %703 = vmatprep.subr.mxu0 0.0
  %704 = vmatpush1.msra.mxu0 0.0
  %705 = vmatprep.subr.mxu0 0.0
  %706 = vmatpush1.msra.mxu0 0.0
  %707 = vmatprep.subr.mxu0 0.0
  %708 = vmatpush1.msra.mxu0 0.0
  %709 = vmatprep.subr.mxu0 0.0
  %710 = vmatpush1.msra.mxu0 0.0
  %711 = vmatprep.subr.mxu0 0.0
  %712 = vmatpush1.msra.mxu0 0.0
  %713 = vmatprep.subr.mxu0 0.0
  %714 = vmatpush1.msra.mxu0 0.0
  %715 = vmatprep.subr.mxu0 0.0
  %716 = vmatpush1.msra.mxu0 0.0
  %717 = vmatprep.subr.mxu0 0.0
  %718 = vmatpush1.msra.mxu0 0.0
  %719 = vmatprep.subr.mxu0 0.0
  %720 = vmatpush1.msra.mxu0 0.0
  %721 = vmatprep.subr.mxu0 0.0
  %722 = vmatpush1.msra.mxu0 0.0
  %723 = vmatprep.subr.mxu0 0.0
  %724 = vmatpush1.msra.mxu0 0.0
  %725 = vmatprep.subr.mxu0 0.0
  %726 = vmatpush1.msra.mxu0 0.0
  %727 = vmatprep.subr.mxu0 0.0
  %728 = vmatpush1.msra.mxu0 0.0
  %729 = vmatprep.subr.mxu0 0.0
  %730 = vmatpush1.msra.mxu0 0.0
  %731 = vmatprep.subr.mxu0 0.0
  %732 = vmatpush1.msra.mxu0 0.0
  %733 = vmatprep.subr.mxu0 0.0
  %734 = vmatpush1.msra.mxu0 0.0
  %735 = vmatprep.subr.mxu0 0.0
  %736 = vmatpush1.msra.mxu0 0.0
  %737 = vmatprep.mubr.f32.mxu0 0.0
  %738 = vmatmul.mubr.f32.gmra.mrb[0].mxu0 %v669
  %v739 = vpop.f32.mrb[0].mxu0
  %v740 = vadd.f32 %v661, %v739
  %v741 = vpop.f32.mrb[0].mxu0
  %742 = vmatprep.mubr.f32.mxu0 0.0
  %743 = vmatmul.mubr.f32.gmra.mrb[0].mxu0 %v671
  %v744 = vpop.f32.mrb[0].mxu0
  %v745 = vadd.f32 %v661, %v744
  %v746 = vpop.f32.mrb[0].mxu0
  %747 = vdwg.mxu0
  %748 = vmax.xlane.f32.xlu0 %v740
  %v749 = vpop.xlane.xlu0 %748
  %750 = vmax.xlane.f32.xlu0 %v745
  %v751 = vpop.xlane.xlu0 %750
  %v752 = vsub.f32 %v740, %v749
  %v753 = vsub.f32 %v745, %v751
  %v754 = vmul.f32 %v752, 1.442695
  %v755 = vpow.pop %v754
  %v756 = vmul.f32 %v753, 1.442695
  %v757 = vpow.pop %v756
  %758 = vadd.xlane.f32.xlu0 %v755
  %v759 = vpop.xlane.xlu0 %758
  %760 = vadd.xlane.f32.xlu0 %v757
  %v761 = vpop.xlane.xlu0 %760
  %v762 = vlog2.pop %v759
  %v763 = vmul.f32 %v762, 0.6931472
  %v764 = vlog2.pop %v761
  %v765 = vmul.f32 %v764, 0.6931472
  %v766 = vsub.f32 %v752, %v763
  %v767 = vsub.f32 %v753, %v765
  %768 = vst [vmem:[%s13] sm:$0xff] %v766
  %769 = vst [vmem:[%s13 + $0x8] sm:$0xff] %v767
  // Predicated region
  $region54: #{translation_forward.1} parent=0 // pred_check
    _
  $region55: #{translation_forward.1} parent=0 // pred_check_branch
    %771 = sbr.rel (0) target = $region57
  $region56: #{translation_forward.1} parent=0 // pred_region
    _
  $region57: #{translation_forward.1} parent=0 // pred_fallthru
    _
  // Predicated region
  $region58: #{translation_forward.1} parent=0 // pred_check
    _
  $region59: #{translation_forward.1} parent=0 // pred_check_branch
    %773 = sbr.rel (0) target = $region61
  $region60: #{translation_forward.1} parent=0 // pred_region
    _
  $region61: #{translation_forward.1} parent=0 // pred_fallthru
    _

</llo_original>
